<compile_context>
chip_gen: v7x
topology: tpu7x:2x2x1
jax: 0.10.0
libtpu: 0.0.40
codegen_flags: <defaults>
</compile_context>

<pallas_src>
import jax
import jax.numpy as jnp
from jax.experimental import pallas as pl
from jax.experimental.pallas import tpu as pltpu


def _round_up(x: int, m: int) -> int:
    return ((x + m - 1) // m) * m


def _matmul_kernel(a_ref, b_ref, o_ref):
    # grid = (Mp//tm, Np//tn, Kp//tk); k (last axis) is the reduction.
    # The output (i, j) block stays resident in VMEM across the k axis, so we
    # accumulate directly into it (output dtype is float32).
    @pl.when(pl.program_id(2) == 0)
    def _():
        o_ref[...] = jnp.zeros_like(o_ref)

    o_ref[...] += jnp.dot(
        a_ref[...], b_ref[...], preferred_element_type=jnp.float32
    )


def matrix_multiply(a: jax.Array, b: jax.Array, *,
                    tm: int = 256, tn: int = 512, tk: int = 1024) -> jax.Array:
    """C = A @ B via a tiled Pallas TPU kernel. A:(M,K) B:(K,N) -> C:(M,N)."""
    M, K = a.shape
    K2, N = b.shape
    assert K == K2, "inner dimensions must match"

    a = a.astype(jnp.float32)
    b = b.astype(jnp.float32)
    out_dtype = jnp.float32
    itemsize = 4

    # Clamp tiles to the (layout-padded) problem dims; keeps (8, 128)
    # granularity since the defaults and the round-ups are already multiples.
    tm = min(tm, _round_up(M, 8))
    tn = min(tn, _round_up(N, 128))
    tk = min(tk, _round_up(K, 128))

    # Keep double-buffered A/B blocks + resident C block inside a conservative
    # VMEM budget (fits v7x's 64 MiB physical per TensorCore with headroom).
    vmem_budget = 24 * (1 << 20)

    def footprint(tm_, tn_, tk_):
        return 2 * (tm_ * tk_ + tk_ * tn_) * itemsize + 2 * tm_ * tn_ * 4

    while footprint(tm, tn, tk) > vmem_budget and tk > 128:
        tk //= 2
    while footprint(tm, tn, tk) > vmem_budget and tn > 128:
        tn //= 2

    # Pad once in the wrapper so hardware-optimal tiles work for any M/N/K.
    Mp, Np, Kp = _round_up(M, tm), _round_up(N, tn), _round_up(K, tk)
    if (Mp, Kp) != (M, K):
        a = jnp.pad(a, ((0, Mp - M), (0, Kp - K)))
    if (Kp, Np) != (K, N):
        b = jnp.pad(b, ((0, Kp - K), (0, Np - N)))

    grid = (Mp // tm, Np // tn, Kp // tk)

    vmem_limit_bytes = min(max(footprint(tm, tn, tk) + (8 << 20), 32 << 20),
                           44 << 20)

    out = pl.pallas_call(
        _matmul_kernel,
        out_shape=jax.ShapeDtypeStruct((Mp, Np), out_dtype),
        grid_spec=pltpu.PrefetchScalarGridSpec(
            num_scalar_prefetch=0,
            grid=grid,
            in_specs=[
                pl.BlockSpec((tm, tk), lambda i, j, k: (i, k)),
                pl.BlockSpec((tk, tn), lambda i, j, k: (k, j)),
            ],
            out_specs=pl.BlockSpec((tm, tn), lambda i, j, k: (i, j)),
        ),
        compiler_params=pltpu.CompilerParams(
            dimension_semantics=("parallel", "parallel", "arbitrary"),
            vmem_limit_bytes=vmem_limit_bytes,
        ),
        cost_estimate=pl.CostEstimate(
            flops=2 * M * N * K,
            transcendentals=0,
            bytes_accessed=itemsize * (M * K + K * N) + 4 * M * N,
        ),
    )(a, b)

    if (Mp, Np) != (M, N):
        out = out[:M, :N]
    return out


if __name__ == "__main__":
    key = jax.random.PRNGKey(0)
    ka, kb, kc, kd = jax.random.split(key, 4)

    # Case 1: small, tile-aligned shapes (float32, like the CUDA reference).
    M, K, N = 128, 256, 128
    A = jax.random.normal(ka, (M, K), dtype=jnp.float32)
    B = jax.random.normal(kb, (K, N), dtype=jnp.float32)
    C = jax.block_until_ready(matrix_multiply(A, B))
    C_ref = jnp.dot(A, B)
    assert C.shape == (M, N)
    assert jnp.allclose(C, C_ref, atol=1e-3, rtol=1e-4), \
        "mismatch vs reference (case 1)"

    # Case 2: non-divisible shapes exercise the pad-and-slice path.
    M2, K2, N2 = 96, 200, 160
    A2 = jax.random.normal(kc, (M2, K2), dtype=jnp.float32)
    B2 = jax.random.normal(kd, (K2, N2), dtype=jnp.float32)
    C2 = jax.block_until_ready(matrix_multiply(A2, B2))
    C2_ref = jnp.dot(A2, B2)
    assert C2.shape == (M2, N2)
    assert jnp.allclose(C2, C2_ref, atol=1e-3, rtol=1e-4), \
        "mismatch vs reference (case 2)"

    print("KERNEL_OK")
</pallas_src>

<mosaic_0001>
module attributes {stable_mosaic.version = 11 : i64} {
  func.func @_matmul_kernel(%arg0: i32, %arg1: i32, %arg2: i32, %arg3: memref<128x256xf32, #tpu.memory_space<vmem>>, %arg4: memref<256x128xf32, #tpu.memory_space<vmem>>, %arg5: memref<128x128xf32, #tpu.memory_space<vmem>>) attributes {dimension_semantics = [#tpu.dimension_semantics<parallel>, #tpu.dimension_semantics<parallel>, #tpu.dimension_semantics<arbitrary>], iteration_bounds = array<i64: 1, 1, 1>, scalar_prefetch = 0 : i64, scratch_operands = 0 : i64, tpu.core_type = #tpu.core_type<tc>, window_params = [{transform_indices = @transform_0, window_bounds = array<i64: 128, 256>}, {transform_indices = @transform_1, window_bounds = array<i64: 256, 128>}, {transform_indices = @transform_2, window_bounds = array<i64: 128, 128>}]} {
    %c0_i32 = arith.constant 0 : i32
    %0 = arith.cmpi eq, %arg2, %c0_i32 : i32
    %1 = arith.extui %0 : i1 to i32
    %c0_i32_0 = arith.constant 0 : i32
    %2 = arith.cmpi ne, %1, %c0_i32_0 : i32
    scf.if %2 {
      %cst_8 = arith.constant 0.000000e+00 : f32
      %9 = vector.broadcast %cst_8 : f32 to vector<128x128xf32>
      %c0_9 = arith.constant 0 : index
      %c0_10 = arith.constant 0 : index
      %10 = vector.load %arg5[%c0_9, %c0_10] : memref<128x128xf32, #tpu.memory_space<vmem>>, vector<128x128xf32>
      tpu.vector_store %arg5[%c0_9, %c0_10], %9 {strides = array<i32>} : memref<128x128xf32, #tpu.memory_space<vmem>>, vector<128x128xf32>,
    } else {
    }
    %c0 = arith.constant 0 : index
    %c0_1 = arith.constant 0 : index
    %3 = vector.load %arg5[%c0, %c0_1] : memref<128x128xf32, #tpu.memory_space<vmem>>, vector<128x128xf32>
    %c0_2 = arith.constant 0 : index
    %c0_3 = arith.constant 0 : index
    %4 = vector.load %arg3[%c0_2, %c0_3] : memref<128x256xf32, #tpu.memory_space<vmem>>, vector<128x256xf32>
    %c0_4 = arith.constant 0 : index
    %c0_5 = arith.constant 0 : index
    %5 = vector.load %arg4[%c0_4, %c0_5] : memref<256x128xf32, #tpu.memory_space<vmem>>, vector<256x128xf32>
    %cst = arith.constant dense<0.000000e+00> : vector<128x128xf32>
    %6 = tpu.matmul %4, %5, %cst {dimension_numbers = #tpu.dot_dimension_numbers<[1], [0], [0], [1], [0, 0, 1, 1], [], []>} : vector<128x256xf32>, vector<256x128xf32>, vector<128x128xf32> -> vector<128x128xf32>
    %7 = arith.addf %3, %6 : vector<128x128xf32>
    %c0_6 = arith.constant 0 : index
    %c0_7 = arith.constant 0 : index
    %8 = vector.load %arg5[%c0_6, %c0_7] : memref<128x128xf32, #tpu.memory_space<vmem>>, vector<128x128xf32>
    tpu.vector_store %arg5[%c0_6, %c0_7], %7 {strides = array<i32>} : memref<128x128xf32, #tpu.memory_space<vmem>>, vector<128x128xf32>,
    return
  }
  func.func @transform_0(%arg0: i32, %arg1: i32, %arg2: i32) -> (i32, i32) {
    %c0_i32 = arith.constant 0 : i32
    return %arg0, %arg2 : i32, i32
  }
  func.func @transform_1(%arg0: i32, %arg1: i32, %arg2: i32) -> (i32, i32) {
    %c0_i32 = arith.constant 0 : i32
    return %arg2, %arg1 : i32, i32
  }
  func.func @transform_2(%arg0: i32, %arg1: i32, %arg2: i32) -> (i32, i32) {
    %c0_i32 = arith.constant 0 : i32
    return %arg0, %arg1 : i32, i32
  }
}

</mosaic_0001>

<llo_original>
// kernel: tpu_custom_call.1
$region0: #{tpu_custom_call.1}
  #allocation0 [shape = 'u32[]', space=smem, size = 0x4, offset = 0x4, fixed_abs, tag = 'smem constant byte address 0x4 - core index']
  #allocation1 [shape = 'u32[144,128]{1,0:T(1,128)}', space=vmem, size = 0x12000, scoped, tag = 'internal scratch']
  %s0 = inlined_call_operand.hbm [shape: f32[128,256], index: 0, kind: input, shape index: {}]
  %s1 = inlined_call_operand.hbm [shape: f32[256,128], index: 1, kind: input, shape index: {}]
  %s2 = inlined_call_operand.hbm [shape: f32[128,128], index: 2, kind: output, shape index: {}]
  %s3 = sld [smem:[#allocation0]]
  $region30: #{tpu_custom_call.1} parent=0
    _
  %s5 = ssub.s32 1, %s3
  %s6 = scalar_select 0, %s5, %s3
  $region1: #{tpu_custom_call.1} parent=0
    #allocation2 [shape = 'u8[131072]{0}', space=vmem, size = 0x20000, scoped, tag = 'input window, operand 0, single buffered']
    #allocation3 [shape = 's32[1]{0}', space=sflag, size = 0x4, scoped, tag = 'scoped memory for tpu_custom_call.1']
    #allocation4 [shape = 's32[1]{0}', space=sflag, size = 0x4, scoped, tag = 'scoped memory for tpu_custom_call.1']
    #allocation5 [shape = 'u8[131072]{0}', space=vmem, size = 0x20000, scoped, tag = 'input window, operand 1, single buffered']
    #allocation6 [shape = 's32[1]{0}', space=sflag, size = 0x4, scoped, tag = 'scoped memory for tpu_custom_call.1']
    #allocation7 [shape = 'u8[65536]{0}', space=vmem, size = 0x10000, scoped, tag = 'output window, operand 0, single buffered']
    %7 = vsyncpa [#allocation3], 0
    %8 = vsyncpa [#allocation6], 0
    %9 = vsyncpa [#allocation4], 0
    // Predicated region
    $region2: #{tpu_custom_call.1} parent=1 // pred_check
      _
    $region3: #{tpu_custom_call.1} parent=1 // pred_check_branch
      %11 = sbr.rel (0) target = $region5
    $region4: #{tpu_custom_call.1} parent=1 // pred_region
      %s13 = ssub.s32 4096, 4096
      %14 = vsyncadd [#allocation3], %s13
      %s15 = sshll.u32 [#allocation2], 4
      %s16 = int_to_ptr.vmem [resolvable:$true] %s15
      %21 = dma.hbm_to_vmem [thread:$0]  %s0, 4096, %s16, [#allocation3], 256, 256, 16
    $region5: #{tpu_custom_call.1} parent=1 // pred_fallthru
      _
    // Predicated region
    $region6: #{tpu_custom_call.1} parent=1 // pred_check
      _
    $region7: #{tpu_custom_call.1} parent=1 // pred_check_branch
      %23 = sbr.rel (0) target = $region9
    $region8: #{tpu_custom_call.1} parent=1 // pred_region
      %s25 = ssub.s32 4096, 4096
      %26 = vsyncadd [#allocation6], %s25
      %s27 = sshll.u32 [#allocation5], 4
      %s28 = int_to_ptr.vmem [resolvable:$true] %s27
      %33 = dma.hbm_to_vmem [thread:$0]  %s1, 4096, %s28, [#allocation6], 128, 128, 8
    $region9: #{tpu_custom_call.1} parent=1 // pred_fallthru
      _
    // Predicated region
    $region10: #{tpu_custom_call.1} parent=1 // pred_check
      _
    $region11: #{tpu_custom_call.1} parent=1 // pred_check_branch
      %35 = sbr.rel (0) target = $region13
    $region12: #{tpu_custom_call.1} parent=1 // pred_region
      %36 = dma.done [#allocation3], 4096
    $region13: #{tpu_custom_call.1} parent=1 // pred_fallthru
      _
    // Predicated region
    $region14: #{tpu_custom_call.1} parent=1 // pred_check
      _
    $region15: #{tpu_custom_call.1} parent=1 // pred_check_branch
      %38 = sbr.rel (0) target = $region17
    $region16: #{tpu_custom_call.1} parent=1 // pred_region
      %39 = dma.done [#allocation6], 4096
    $region17: #{tpu_custom_call.1} parent=1 // pred_fallthru
      _
    %p40 = scmp.eq.s32.totalorder 0, 0
    // Predicated region
    $region18: #{tpu_custom_call.1} parent=1 // pred_check
      %p41 = pneg %p40
    $region19: #{tpu_custom_call.1} parent=1 // pred_check_branch
      %43 = sbr.rel (%p41) target = $region21
    $region20: #{tpu_custom_call.1} parent=1 // pred_region
      %44 = vst [vmem:[#allocation7] sm:$0xff] 0.0
      %45 = vst [vmem:[#allocation7 + $0x8] sm:$0xff] 0.0
      %46 = vst [vmem:[#allocation7 + $0x10] sm:$0xff] 0.0
      %47 = vst [vmem:[#allocation7 + $0x18] sm:$0xff] 0.0
      %48 = vst [vmem:[#allocation7 + $0x20] sm:$0xff] 0.0
      %49 = vst [vmem:[#allocation7 + $0x28] sm:$0xff] 0.0
      %50 = vst [vmem:[#allocation7 + $0x30] sm:$0xff] 0.0
      %51 = vst [vmem:[#allocation7 + $0x38] sm:$0xff] 0.0
      %52 = vst [vmem:[#allocation7 + $0x40] sm:$0xff] 0.0
      %53 = vst [vmem:[#allocation7 + $0x48] sm:$0xff] 0.0
      %54 = vst [vmem:[#allocation7 + $0x50] sm:$0xff] 0.0
      %55 = vst [vmem:[#allocation7 + $0x58] sm:$0xff] 0.0
      %56 = vst [vmem:[#allocation7 + $0x60] sm:$0xff] 0.0
      %57 = vst [vmem:[#allocation7 + $0x68] sm:$0xff] 0.0
      %58 = vst [vmem:[#allocation7 + $0x70] sm:$0xff] 0.0
      %59 = vst [vmem:[#allocation7 + $0x78] sm:$0xff] 0.0
    $region21: #{tpu_custom_call.1} parent=1 // pred_fallthru
      _
    %v60 = vld [vmem:[#allocation7] sm:$0xff]
    %v61 = vld [vmem:[#allocation7 + $0x8] sm:$0xff]
    %v62 = vld [vmem:[#allocation7 + $0x10] sm:$0xff]
    %v63 = vld [vmem:[#allocation7 + $0x18] sm:$0xff]
    %v64 = vld [vmem:[#allocation7 + $0x20] sm:$0xff]
    %v65 = vld [vmem:[#allocation7 + $0x28] sm:$0xff]
    %v66 = vld [vmem:[#allocation7 + $0x30] sm:$0xff]
    %v67 = vld [vmem:[#allocation7 + $0x38] sm:$0xff]
    %v68 = vld [vmem:[#allocation7 + $0x40] sm:$0xff]
    %v69 = vld [vmem:[#allocation7 + $0x48] sm:$0xff]
    %v70 = vld [vmem:[#allocation7 + $0x50] sm:$0xff]
    %v71 = vld [vmem:[#allocation7 + $0x58] sm:$0xff]
    %v72 = vld [vmem:[#allocation7 + $0x60] sm:$0xff]
    %v73 = vld [vmem:[#allocation7 + $0x68] sm:$0xff]
    %v74 = vld [vmem:[#allocation7 + $0x70] sm:$0xff]
    %v75 = vld [vmem:[#allocation7 + $0x78] sm:$0xff]
    %v76 = vld [vmem:[#allocation2] sm:$0xff]
    %v77 = vld [vmem:[#allocation2 + $0x8] sm:$0xff]
    %v78 = vld [vmem:[#allocation2 + $0x10] sm:$0xff]
    %v79 = vld [vmem:[#allocation2 + $0x18] sm:$0xff]
    %v80 = vld [vmem:[#allocation2 + $0x20] sm:$0xff]
    %v81 = vld [vmem:[#allocation2 + $0x28] sm:$0xff]
    %v82 = vld [vmem:[#allocation2 + $0x30] sm:$0xff]
    %v83 = vld [vmem:[#allocation2 + $0x38] sm:$0xff]
    %v84 = vld [vmem:[#allocation2 + $0x40] sm:$0xff]
    %v85 = vld [vmem:[#allocation2 + $0x48] sm:$0xff]
    %v86 = vld [vmem:[#allocation2 + $0x50] sm:$0xff]
    %v87 = vld [vmem:[#allocation2 + $0x58] sm:$0xff]
    %v88 = vld [vmem:[#allocation2 + $0x60] sm:$0xff]
    %v89 = vld [vmem:[#allocation2 + $0x68] sm:$0xff]
    %v90 = vld [vmem:[#allocation2 + $0x70] sm:$0xff]
    %v91 = vld [vmem:[#allocation2 + $0x78] sm:$0xff]
    %v92 = vld [vmem:[#allocation2 + $0x80] sm:$0xff]
    %v93 = vld [vmem:[#allocation2 + $0x88] sm:$0xff]
    %v94 = vld [vmem:[#allocation2 + $0x90] sm:$0xff]
    %v95 = vld [vmem:[#allocation2 + $0x98] sm:$0xff]
    %v96 = vld [vmem:[#allocation2 + $0xa0] sm:$0xff]
    %v97 = vld [vmem:[#allocation2 + $0xa8] sm:$0xff]
    %v98 = vld [vmem:[#allocation2 + $0xb0] sm:$0xff]
    %v99 = vld [vmem:[#allocation2 + $0xb8] sm:$0xff]
    %v100 = vld [vmem:[#allocation2 + $0xc0] sm:$0xff]
    %v101 = vld [vmem:[#allocation2 + $0xc8] sm:$0xff]
    %v102 = vld [vmem:[#allocation2 + $0xd0] sm:$0xff]
    %v103 = vld [vmem:[#allocation2 + $0xd8] sm:$0xff]
    %v104 = vld [vmem:[#allocation2 + $0xe0] sm:$0xff]
    %v105 = vld [vmem:[#allocation2 + $0xe8] sm:$0xff]
    %v106 = vld [vmem:[#allocation2 + $0xf0] sm:$0xff]
    %v107 = vld [vmem:[#allocation2 + $0xf8] sm:$0xff]
    %v108 = vld [vmem:[#allocation5] sm:$0xff]
    %v109 = vld [vmem:[#allocation5 + $0x8] sm:$0xff]
    %v110 = vld [vmem:[#allocation5 + $0x10] sm:$0xff]
    %v111 = vld [vmem:[#allocation5 + $0x18] sm:$0xff]
    %v112 = vld [vmem:[#allocation5 + $0x20] sm:$0xff]
    %v113 = vld [vmem:[#allocation5 + $0x28] sm:$0xff]
    %v114 = vld [vmem:[#allocation5 + $0x30] sm:$0xff]
    %v115 = vld [vmem:[#allocation5 + $0x38] sm:$0xff]
    %v116 = vld [vmem:[#allocation5 + $0x40] sm:$0xff]
    %v117 = vld [vmem:[#allocation5 + $0x48] sm:$0xff]
    %v118 = vld [vmem:[#allocation5 + $0x50] sm:$0xff]
    %v119 = vld [vmem:[#allocation5 + $0x58] sm:$0xff]
    %v120 = vld [vmem:[#allocation5 + $0x60] sm:$0xff]
    %v121 = vld [vmem:[#allocation5 + $0x68] sm:$0xff]
    %v122 = vld [vmem:[#allocation5 + $0x70] sm:$0xff]
    %v123 = vld [vmem:[#allocation5 + $0x78] sm:$0xff]
    %v124 = vld [vmem:[#allocation5 + $0x80] sm:$0xff]
    %v125 = vld [vmem:[#allocation5 + $0x88] sm:$0xff]
    %v126 = vld [vmem:[#allocation5 + $0x90] sm:$0xff]
    %v127 = vld [vmem:[#allocation5 + $0x98] sm:$0xff]
    %v128 = vld [vmem:[#allocation5 + $0xa0] sm:$0xff]
    %v129 = vld [vmem:[#allocation5 + $0xa8] sm:$0xff]
    %v130 = vld [vmem:[#allocation5 + $0xb0] sm:$0xff]
    %v131 = vld [vmem:[#allocation5 + $0xb8] sm:$0xff]
    %v132 = vld [vmem:[#allocation5 + $0xc0] sm:$0xff]
    %v133 = vld [vmem:[#allocation5 + $0xc8] sm:$0xff]
    %v134 = vld [vmem:[#allocation5 + $0xd0] sm:$0xff]
    %v135 = vld [vmem:[#allocation5 + $0xd8] sm:$0xff]
    %v136 = vld [vmem:[#allocation5 + $0xe0] sm:$0xff]
    %v137 = vld [vmem:[#allocation5 + $0xe8] sm:$0xff]
    %v138 = vld [vmem:[#allocation5 + $0xf0] sm:$0xff]
    %v139 = vld [vmem:[#allocation5 + $0xf8] sm:$0xff]
    %140 = vmatprep.subr.mxu0 0.0
    %141 = vmatpush1.msra.mxu0 %v108
    %142 = vmatprep.subr.mxu0 0.0
    %143 = vmatpush1.msra.mxu0 %v109
    %144 = vmatprep.subr.mxu0 0.0
    %145 = vmatpush1.msra.mxu0 %v110
    %146 = vmatprep.subr.mxu0 0.0
    %147 = vmatpush1.msra.mxu0 %v111
    %148 = vmatprep.subr.mxu0 0.0
    %149 = vmatpush1.msra.mxu0 %v112
    %150 = vmatprep.subr.mxu0 0.0
    %151 = vmatpush1.msra.mxu0 %v113
    %152 = vmatprep.subr.mxu0 0.0
    %153 = vmatpush1.msra.mxu0 %v114
    %154 = vmatprep.subr.mxu0 0.0
    %155 = vmatpush1.msra.mxu0 %v115
    %156 = vmatprep.subr.mxu0 0.0
    %157 = vmatpush1.msra.mxu0 %v116
    %158 = vmatprep.subr.mxu0 0.0
    %159 = vmatpush1.msra.mxu0 %v117
    %160 = vmatprep.subr.mxu0 0.0
    %161 = vmatpush1.msra.mxu0 %v118
    %162 = vmatprep.subr.mxu0 0.0
    %163 = vmatpush1.msra.mxu0 %v119
    %164 = vmatprep.subr.mxu0 0.0
    %165 = vmatpush1.msra.mxu0 %v120
    %166 = vmatprep.subr.mxu0 0.0
    %167 = vmatpush1.msra.mxu0 %v121
    %168 = vmatprep.subr.mxu0 0.0
    %169 = vmatpush1.msra.mxu0 %v122
    %170 = vmatprep.subr.mxu0 0.0
    %171 = vmatpush1.msra.mxu0 %v123
    %172 = vmatprep.subr.mxu0 0.0
    %173 = vmatpush1.msra.mxu0 %v124
    %174 = vmatprep.subr.mxu0 0.0
    %175 = vmatpush1.msra.mxu0 %v125
    %176 = vmatprep.subr.mxu0 0.0
    %177 = vmatpush1.msra.mxu0 %v126
    %178 = vmatprep.subr.mxu0 0.0
    %179 = vmatpush1.msra.mxu0 %v127
    %180 = vmatprep.subr.mxu0 0.0
    %181 = vmatpush1.msra.mxu0 %v128
    %182 = vmatprep.subr.mxu0 0.0
    %183 = vmatpush1.msra.mxu0 %v129
    %184 = vmatprep.subr.mxu0 0.0
    %185 = vmatpush1.msra.mxu0 %v130
    %186 = vmatprep.subr.mxu0 0.0
    %187 = vmatpush1.msra.mxu0 %v131
    %188 = vmatprep.subr.mxu0 0.0
    %189 = vmatpush1.msra.mxu0 %v132
    %190 = vmatprep.subr.mxu0 0.0
    %191 = vmatpush1.msra.mxu0 %v133
    %192 = vmatprep.subr.mxu0 0.0
    %193 = vmatpush1.msra.mxu0 %v134
    %194 = vmatprep.subr.mxu0 0.0
    %195 = vmatpush1.msra.mxu0 %v135
    %196 = vmatprep.subr.mxu0 0.0
    %197 = vmatpush1.msra.mxu0 %v136
    %198 = vmatprep.subr.mxu0 0.0
    %199 = vmatpush1.msra.mxu0 %v137
    %200 = vmatprep.subr.mxu0 0.0
    %201 = vmatpush1.msra.mxu0 %v138
    %202 = vmatprep.subr.mxu0 0.0
    %203 = vmatpush1.msra.mxu0 %v139
    %204 = vmatprep.mubr.f32.mxu0 %v77
    %205 = vmatmul.mubr.f32.gmra.mrb[0].mxu0 %v76
    %v206 = vpop.f32.mrb[0].mxu0
    %v207 = vadd.f32 0.0, %v206
    %v208 = vpop.f32.mrb[0].mxu0
    %209 = vmatprep.mubr.f32.mxu0 %v79
    %210 = vmatmul.mubr.f32.gmra.mrb[0].mxu0 %v78
    %v211 = vpop.f32.mrb[0].mxu0
    %v212 = vadd.f32 0.0, %v211
    %v213 = vpop.f32.mrb[0].mxu0
    %214 = vmatprep.mubr.f32.mxu0 %v81
    %215 = vmatmul.mubr.f32.gmra.mrb[0].mxu0 %v80
    %v216 = vpop.f32.mrb[0].mxu0
    %v217 = vadd.f32 0.0, %v216
    %v218 = vpop.f32.mrb[0].mxu0
    %219 = vmatprep.mubr.f32.mxu0 %v83
    %220 = vmatmul.mubr.f32.gmra.mrb[0].mxu0 %v82
    %v221 = vpop.f32.mrb[0].mxu0
    %v222 = vadd.f32 0.0, %v221
    %v223 = vpop.f32.mrb[0].mxu0
    %224 = vmatprep.mubr.f32.mxu0 %v85
    %225 = vmatmul.mubr.f32.gmra.mrb[0].mxu0 %v84
    %v226 = vpop.f32.mrb[0].mxu0
    %v227 = vadd.f32 0.0, %v226
    %v228 = vpop.f32.mrb[0].mxu0
    %229 = vmatprep.mubr.f32.mxu0 %v87
    %230 = vmatmul.mubr.f32.gmra.mrb[0].mxu0 %v86
    %v231 = vpop.f32.mrb[0].mxu0
    %v232 = vadd.f32 0.0, %v231
    %v233 = vpop.f32.mrb[0].mxu0
    %234 = vmatprep.mubr.f32.mxu0 %v89
    %235 = vmatmul.mubr.f32.gmra.mrb[0].mxu0 %v88
    %v236 = vpop.f32.mrb[0].mxu0
    %v237 = vadd.f32 0.0, %v236
    %v238 = vpop.f32.mrb[0].mxu0
    %239 = vmatprep.mubr.f32.mxu0 %v91
    %240 = vmatmul.mubr.f32.gmra.mrb[0].mxu0 %v90
    %v241 = vpop.f32.mrb[0].mxu0
    %v242 = vadd.f32 0.0, %v241
    %v243 = vpop.f32.mrb[0].mxu0
    %244 = vmatprep.mubr.f32.mxu0 %v93
    %245 = vmatmul.mubr.f32.gmra.mrb[0].mxu0 %v92
    %v246 = vpop.f32.mrb[0].mxu0
    %v247 = vadd.f32 0.0, %v246
    %v248 = vpop.f32.mrb[0].mxu0
    %249 = vmatprep.mubr.f32.mxu0 %v95
    %250 = vmatmul.mubr.f32.gmra.mrb[0].mxu0 %v94
    %v251 = vpop.f32.mrb[0].mxu0
    %v252 = vadd.f32 0.0, %v251
    %v253 = vpop.f32.mrb[0].mxu0
    %254 = vmatprep.mubr.f32.mxu0 %v97
    %255 = vmatmul.mubr.f32.gmra.mrb[0].mxu0 %v96
    %v256 = vpop.f32.mrb[0].mxu0
    %v257 = vadd.f32 0.0, %v256
    %v258 = vpop.f32.mrb[0].mxu0
    %259 = vmatprep.mubr.f32.mxu0 %v99
    %260 = vmatmul.mubr.f32.gmra.mrb[0].mxu0 %v98
    %v261 = vpop.f32.mrb[0].mxu0
    %v262 = vadd.f32 0.0, %v261
    %v263 = vpop.f32.mrb[0].mxu0
    %264 = vmatprep.mubr.f32.mxu0 %v101
    %265 = vmatmul.mubr.f32.gmra.mrb[0].mxu0 %v100
    %v266 = vpop.f32.mrb[0].mxu0
    %v267 = vadd.f32 0.0, %v266
    %v268 = vpop.f32.mrb[0].mxu0
    %269 = vmatprep.mubr.f32.mxu0 %v103
    %270 = vmatmul.mubr.f32.gmra.mrb[0].mxu0 %v102
    %v271 = vpop.f32.mrb[0].mxu0
    %v272 = vadd.f32 0.0, %v271
    %v273 = vpop.f32.mrb[0].mxu0
    %274 = vmatprep.mubr.f32.mxu0 %v105
    %275 = vmatmul.mubr.f32.gmra.mrb[0].mxu0 %v104
    %v276 = vpop.f32.mrb[0].mxu0
    %v277 = vadd.f32 0.0, %v276
    %v278 = vpop.f32.mrb[0].mxu0
    %279 = vmatprep.mubr.f32.mxu0 %v107
    %280 = vmatmul.mubr.f32.gmra.mrb[0].mxu0 %v106
    %v281 = vpop.f32.mrb[0].mxu0
    %v282 = vadd.f32 0.0, %v281
    %v283 = vpop.f32.mrb[0].mxu0
    %284 = vdwg.mxu0
    %v285 = vadd.f32 %v60, %v207
    %v286 = vadd.f32 %v61, %v212
    %v287 = vadd.f32 %v62, %v217
    %v288 = vadd.f32 %v63, %v222
    %v289 = vadd.f32 %v64, %v227
    %v290 = vadd.f32 %v65, %v232
    %v291 = vadd.f32 %v66, %v237
    %v292 = vadd.f32 %v67, %v242
    %v293 = vadd.f32 %v68, %v247
    %v294 = vadd.f32 %v69, %v252
    %v295 = vadd.f32 %v70, %v257
    %v296 = vadd.f32 %v71, %v262
    %v297 = vadd.f32 %v72, %v267
    %v298 = vadd.f32 %v73, %v272
    %v299 = vadd.f32 %v74, %v277
    %v300 = vadd.f32 %v75, %v282
    %301 = vst [vmem:[#allocation7] sm:$0xff] %v285
    %302 = vst [vmem:[#allocation7 + $0x8] sm:$0xff] %v286
    %303 = vst [vmem:[#allocation7 + $0x10] sm:$0xff] %v287
    %304 = vst [vmem:[#allocation7 + $0x18] sm:$0xff] %v288
    %305 = vst [vmem:[#allocation7 + $0x20] sm:$0xff] %v289
    %306 = vst [vmem:[#allocation7 + $0x28] sm:$0xff] %v290
    %307 = vst [vmem:[#allocation7 + $0x30] sm:$0xff] %v291
    %308 = vst [vmem:[#allocation7 + $0x38] sm:$0xff] %v292
    %309 = vst [vmem:[#allocation7 + $0x40] sm:$0xff] %v293
    %310 = vst [vmem:[#allocation7 + $0x48] sm:$0xff] %v294
    %311 = vst [vmem:[#allocation7 + $0x50] sm:$0xff] %v295
    %312 = vst [vmem:[#allocation7 + $0x58] sm:$0xff] %v296
    %313 = vst [vmem:[#allocation7 + $0x60] sm:$0xff] %v297
    %314 = vst [vmem:[#allocation7 + $0x68] sm:$0xff] %v298
    %315 = vst [vmem:[#allocation7 + $0x70] sm:$0xff] %v299
    %316 = vst [vmem:[#allocation7 + $0x78] sm:$0xff] %v300
    // Predicated region
    $region22: #{tpu_custom_call.1} parent=1 // pred_check
      _
    $region23: #{tpu_custom_call.1} parent=1 // pred_check_branch
      %318 = sbr.rel (0) target = $region25
    $region24: #{tpu_custom_call.1} parent=1 // pred_region
      %s320 = ssub.s32 2048, 2048
      %321 = vsyncadd [#allocation4], %s320
      %s322 = sshll.u32 [#allocation7], 4
      %s323 = int_to_ptr.vmem [resolvable:$true] %s322
      %328 = dma.vmem_to_hbm [thread:$0]  %s323, 2048, %s2, [#allocation4], 128, 128, 8
    $region25: #{tpu_custom_call.1} parent=1 // pred_fallthru
      _
    // Predicated region
    $region26: #{tpu_custom_call.1} parent=1 // pred_check
      _
    $region27: #{tpu_custom_call.1} parent=1 // pred_check_branch
      %330 = sbr.rel (0) target = $region29
    $region28: #{tpu_custom_call.1} parent=1 // pred_region
      %331 = dma.done [#allocation4], 2048
    $region29: #{tpu_custom_call.1} parent=1 // pred_fallthru
      _
    %332 = vsyncpa [#allocation3], 1
    %333 = vsyncpa [#allocation6], 1
    %334 = vsyncpa [#allocation4], 1

</llo_original>
